<compile_context>
chip_gen: v6e
topology: v6e:2x2x1
jax: 0.10.0
libtpu: 0.0.40
codegen_flags: <defaults>
</compile_context>

<pallas_src>
import jax
import jax.numpy as jnp
from jax.experimental import pallas as pl
from jax.experimental.pallas import tpu as pltpu


def _round_up(x, m):
    return (x + m - 1) // m * m


def _lanes(n):
    return _round_up(n, 128)


def _policy_kernel(x_ref, w1_ref, b1_ref, w2_ref, b2_ref, w3_ref, b3_ref, o_ref):
    # x: (TB, S) batch tile (f32 or bf16).  Weights are (in, out), possibly
    # bf16 (MXU inputs only); biases are (1, out) f32 rows.  All elementwise
    # math stays f32 (v5e has no bf16 VPU/EUP).
    x = x_ref[...]
    h1 = jnp.dot(x.astype(w1_ref.dtype), w1_ref[...],
                 preferred_element_type=jnp.float32) + b1_ref[...]
    h1 = jnp.maximum(h1, 0.0)                                    # ReLU
    h2 = jnp.dot(h1.astype(w2_ref.dtype), w2_ref[...],
                 preferred_element_type=jnp.float32) + b2_ref[...]
    h2 = jnp.maximum(h2, 0.0)                                    # ReLU
    h3 = jnp.dot(h2.astype(w3_ref.dtype), w3_ref[...],
                 preferred_element_type=jnp.float32) + b3_ref[...]
    o_ref[...] = jnp.tanh(h3).astype(o_ref.dtype)                # tanh


def policy_network_forward(state, params, *, block_b=4096, use_bf16_matmul=True,
                           pad_output_lanes=False, vmem_limit_bytes=None):
    """state: (B, state_dim) f32 (or bf16); params: (in,out) weights + (1,out) biases."""
    w1, b1 = params["w1"], params["b1"]
    w2, b2 = params["w2"], params["b2"]
    w3, b3 = params["w3"], params["b3"]

    B, S = state.shape
    H1, H2 = w1.shape[1], w2.shape[1]
    A = w3.shape[1]

    # Output width.  Default: narrow (TB, A) output block -> masked stores but
    # ~16x fewer HBM write bytes for small action_dim and no wrapper slice
    # copy.  Optional lane-dense padded path kept behind a flag for v5e.
    if pad_output_lanes:
        A_out = _lanes(A)
        if A_out != A:
            w3 = jnp.pad(w3, ((0, 0), (0, A_out - A)))
            b3 = jnp.pad(b3, ((0, 0), (0, A_out - A)))
    else:
        A_out = A

    # bf16 weights for the MXU (f32 accumulation is preserved in the dots).
    if use_bf16_matmul:
        w1 = w1.astype(jnp.bfloat16)
        w2 = w2.astype(jnp.bfloat16)
        w3 = w3.astype(jnp.bfloat16)

    # Batch tile: sublane aligned (multiple of 8), capped at block_b, and also
    # capped near ceil(B/2) so large batches always give >= 2 grid steps
    # (lets the "parallel" axis use both v7x TensorCores).
    TB = min(_round_up(max(block_b, 8), 8),
             _round_up(pl.cdiv(max(B, 1), 2), 8))
    TB = max(TB, 8)
    # Ragged last block handled by Pallas -- no jnp.pad copy of `state`.
    grid = (pl.cdiv(B, TB),)

    # Rough per-step VMEM footprint (double-buffered I/O tiles, f32 temporaries,
    # resident weights), used to size vmem_limit_bytes with headroom.
    x_itemsize = state.dtype.itemsize
    w_itemsize = w1.dtype.itemsize
    est_vmem = (
        2 * TB * _lanes(S) * x_itemsize                       # x tiles (double buf)
        + 2 * TB * _lanes(A_out) * 4                          # out tiles (double buf)
        + TB * (_lanes(H1) + _lanes(H2) + _lanes(A_out)) * 4  # h1/h2/h3 temporaries
        + 2 * w_itemsize * (_round_up(S, 8) * _lanes(H1)
                            + _round_up(H1, 8) * _lanes(H2)
                            + _round_up(H2, 8) * _lanes(A_out)
                            + 8 * (_lanes(H1) + _lanes(H2) + _lanes(A_out)))
    )
    if vmem_limit_bytes is None:
        # Headroom over the estimate, floor at 32 MiB, ceiling at 56 MiB so we
        # never ask for more than v7x's 64 MiB physical VMEM can back.
        vmem_limit_bytes = min(max(int(est_vmem * 1.5), 32 * 1024 * 1024),
                               56 * 1024 * 1024)

    batch_spec = pl.BlockSpec((TB, S), lambda i: (i, 0))
    out_spec = pl.BlockSpec((TB, A_out), lambda i: (i, 0))

    def resident(arr):
        # Constant block index -> no re-DMA across grid steps (stays in VMEM).
        return pl.BlockSpec(arr.shape, lambda i: (0, 0))

    flops = 2 * B * (S * H1 + H1 * H2 + H2 * A_out)
    bytes_accessed = (
        int(state.size) * x_itemsize
        + sum(int(a.size) * a.dtype.itemsize for a in (w1, b1, w2, b2, w3, b3))
        + B * A_out * 4
    )
    cost = pl.CostEstimate(
        flops=int(flops),
        transcendentals=int(B * A_out),
        bytes_accessed=int(bytes_accessed),
    )

    out = pl.pallas_call(
        _policy_kernel,
        out_shape=jax.ShapeDtypeStruct((B, A_out), jnp.float32),
        grid=grid,
        in_specs=[
            batch_spec,
            resident(w1), resident(b1),
            resident(w2), resident(b2),
            resident(w3), resident(b3),
        ],
        out_specs=out_spec,
        compiler_params=pltpu.CompilerParams(
            dimension_semantics=("parallel",),   # batch tiles shard across TCs on v7x
            vmem_limit_bytes=vmem_limit_bytes,
        ),
        cost_estimate=cost,
    )(state, w1, b1, w2, b2, w3, b3)

    return out[:, :A] if A_out != A else out


def init_params(key, state_dim, action_dim, init_w=0.003):
    """Mirror PyTorch init: fc1/fc2 default U(-1/sqrt(fan_in), .), fc3 U(-init_w, init_w)."""
    k1, k2, k3, k4, k5, k6 = jax.random.split(key, 6)

    def u(k, shape, bound):
        return jax.random.uniform(k, shape, jnp.float32, -bound, bound)

    bnd1 = 1.0 / (state_dim ** 0.5)
    bnd2 = 1.0 / (128 ** 0.5)
    return {
        "w1": u(k1, (state_dim, 128), bnd1), "b1": u(k2, (1, 128), bnd1),
        "w2": u(k3, (128, 64), bnd2),        "b2": u(k4, (1, 64), bnd2),
        "w3": u(k5, (64, action_dim), init_w), "b3": u(k6, (1, action_dim), init_w),
    }


def _reference_forward(state, params):
    """Pure-JAX f32 reference for correctness check."""
    h = jnp.maximum(state @ params["w1"] + params["b1"], 0.0)
    h = jnp.maximum(h @ params["w2"] + params["b2"], 0.0)
    return jnp.tanh(h @ params["w3"] + params["b3"])


if __name__ == "__main__":
    batch, state_dim, action_dim = 2, 32, 8

    key = jax.random.PRNGKey(0)
    k_x, k_p, k_x2 = jax.random.split(key, 3)
    state = jax.random.normal(k_x, (batch, state_dim), jnp.float32)
    params = init_params(k_p, state_dim, action_dim)
    ref = _reference_forward(state, params)

    # Strict check: pure f32 path must match the reference tightly.
    out_f32 = jax.block_until_ready(
        policy_network_forward(state, params, use_bf16_matmul=False))
    assert out_f32.shape == (batch, action_dim)
    assert jnp.allclose(out_f32, ref, atol=1e-5, rtol=1e-5)

    # Default (bf16 MXU inputs, f32 accumulation): loose tolerance vs f32 ref.
    out = jax.block_until_ready(policy_network_forward(state, params))
    assert out.shape == (batch, action_dim)
    assert jnp.allclose(out, ref, atol=5e-2, rtol=5e-2)

    # bf16 state input path (halves input DMA bytes; cast where state is produced).
    out_bf16_in = jax.block_until_ready(
        policy_network_forward(state.astype(jnp.bfloat16), params))
    assert out_bf16_in.shape == (batch, action_dim)
    assert jnp.allclose(out_bf16_in, ref, atol=5e-2, rtol=5e-2)

    # Multi-step grid + ragged last block (300 rows, TB=128 -> 3 steps, tail=44).
    state2 = jax.random.normal(k_x2, (300, state_dim), jnp.float32)
    ref2 = _reference_forward(state2, params)
    out2 = jax.block_until_ready(
        policy_network_forward(state2, params, block_b=128))
    assert out2.shape == (300, action_dim)
    assert jnp.allclose(out2, ref2, atol=5e-2, rtol=5e-2)

    # Optional lane-dense padded-output path (kept behind a flag for v5e).
    out3 = jax.block_until_ready(
        policy_network_forward(state2, params, block_b=128, pad_output_lanes=True))
    assert out3.shape == (300, action_dim)
    assert jnp.allclose(out3, ref2, atol=5e-2, rtol=5e-2)

    print("KERNEL_OK")
</pallas_src>

<mosaic_0001>
module attributes {stable_mosaic.version = 11 : i64} {
  func.func @_policy_kernel(%arg0: i32, %arg1: memref<8x32xf32, #tpu.memory_space<vmem>>, %arg2: memref<32x128xf32, #tpu.memory_space<vmem>>, %arg3: memref<1x128xf32, #tpu.memory_space<vmem>>, %arg4: memref<128x64xf32, #tpu.memory_space<vmem>>, %arg5: memref<1x64xf32, #tpu.memory_space<vmem>>, %arg6: memref<64x8xf32, #tpu.memory_space<vmem>>, %arg7: memref<1x8xf32, #tpu.memory_space<vmem>>, %arg8: memref<8x8xf32, #tpu.memory_space<vmem>>) attributes {dimension_semantics = [#tpu.dimension_semantics<parallel>], iteration_bounds = array<i64: 1>, scalar_prefetch = 0 : i64, scratch_operands = 0 : i64, tpu.core_type = #tpu.core_type<tc>, window_params = [{transform_indices = @transform_0, window_bounds = array<i64: 8, 32>}, {pipeline_mode = #tpu.pipeline_mode<synchronous>, transform_indices = @transform_1, window_bounds = array<i64: 32, 128>}, {pipeline_mode = #tpu.pipeline_mode<synchronous>, transform_indices = @transform_2, window_bounds = array<i64: 1, 128>}, {pipeline_mode = #tpu.pipeline_mode<synchronous>, transform_indices = @transform_3, window_bounds = array<i64: 128, 64>}, {pipeline_mode = #tpu.pipeline_mode<synchronous>, transform_indices = @transform_4, window_bounds = array<i64: 1, 64>}, {pipeline_mode = #tpu.pipeline_mode<synchronous>, transform_indices = @transform_5, window_bounds = array<i64: 64, 8>}, {pipeline_mode = #tpu.pipeline_mode<synchronous>, transform_indices = @transform_6, window_bounds = array<i64: 1, 8>}, {transform_indices = @transform_7, window_bounds = array<i64: 8, 8>}]} {
    %c0 = arith.constant 0 : index
    %c0_0 = arith.constant 0 : index
    %0 = vector.load %arg1[%c0, %c0_0] : memref<8x32xf32, #tpu.memory_space<vmem>>, vector<8x32xf32>
    %c0_1 = arith.constant 0 : index
    %c0_2 = arith.constant 0 : index
    %1 = vector.load %arg2[%c0_1, %c0_2] : memref<32x128xf32, #tpu.memory_space<vmem>>, vector<32x128xf32>
    %cst = arith.constant dense<0.000000e+00> : vector<8x128xf32>
    %2 = tpu.matmul %0, %1, %cst {dimension_numbers = #tpu.dot_dimension_numbers<[1], [0], [0], [1], [0, 0, 1, 1], [], []>} : vector<8x32xf32>, vector<32x128xf32>, vector<8x128xf32> -> vector<8x128xf32>
    %c0_3 = arith.constant 0 : index
    %c0_4 = arith.constant 0 : index
    %3 = vector.load %arg3[%c0_3, %c0_4] : memref<1x128xf32, #tpu.memory_space<vmem>>, vector<1x128xf32>
    %4 = vector.broadcast %3 : vector<1x128xf32> to vector<8x128xf32>
    %5 = arith.addf %2, %4 : vector<8x128xf32>
    %cst_5 = arith.constant 0.000000e+00 : f32
    %6 = vector.broadcast %cst_5 : f32 to vector<8x128xf32>
    %7 = arith.maximumf %5, %6 : vector<8x128xf32>
    %c0_6 = arith.constant 0 : index
    %c0_7 = arith.constant 0 : index
    %8 = vector.load %arg4[%c0_6, %c0_7] : memref<128x64xf32, #tpu.memory_space<vmem>>, vector<128x64xf32>
    %cst_8 = arith.constant dense<0.000000e+00> : vector<8x64xf32>
    %9 = tpu.matmul %7, %8, %cst_8 {dimension_numbers = #tpu.dot_dimension_numbers<[1], [0], [0], [1], [0, 0, 1, 1], [], []>} : vector<8x128xf32>, vector<128x64xf32>, vector<8x64xf32> -> vector<8x64xf32>
    %c0_9 = arith.constant 0 : index
    %c0_10 = arith.constant 0 : index
    %10 = vector.load %arg5[%c0_9, %c0_10] : memref<1x64xf32, #tpu.memory_space<vmem>>, vector<1x64xf32>
    %11 = vector.broadcast %10 : vector<1x64xf32> to vector<8x64xf32>
    %12 = arith.addf %9, %11 : vector<8x64xf32>
    %cst_11 = arith.constant 0.000000e+00 : f32
    %13 = vector.broadcast %cst_11 : f32 to vector<8x64xf32>
    %14 = arith.maximumf %12, %13 : vector<8x64xf32>
    %c0_12 = arith.constant 0 : index
    %c0_13 = arith.constant 0 : index
    %15 = vector.load %arg6[%c0_12, %c0_13] : memref<64x8xf32, #tpu.memory_space<vmem>>, vector<64x8xf32>
    %cst_14 = arith.constant dense<0.000000e+00> : vector<8x8xf32>
    %16 = tpu.matmul %14, %15, %cst_14 {dimension_numbers = #tpu.dot_dimension_numbers<[1], [0], [0], [1], [0, 0, 1, 1], [], []>} : vector<8x64xf32>, vector<64x8xf32>, vector<8x8xf32> -> vector<8x8xf32>
    %c0_15 = arith.constant 0 : index
    %c0_16 = arith.constant 0 : index
    %17 = vector.load %arg7[%c0_15, %c0_16] : memref<1x8xf32, #tpu.memory_space<vmem>>, vector<1x8xf32>
    %18 = vector.broadcast %17 : vector<1x8xf32> to vector<8x8xf32>
    %19 = arith.addf %16, %18 : vector<8x8xf32>
    %20 = math.tanh %19 : vector<8x8xf32>
    %c0_17 = arith.constant 0 : index
    %c0_18 = arith.constant 0 : index
    %21 = vector.load %arg8[%c0_17, %c0_18] : memref<8x8xf32, #tpu.memory_space<vmem>>, vector<8x8xf32>
    tpu.vector_store %arg8[%c0_17, %c0_18], %20 {strides = array<i32>} : memref<8x8xf32, #tpu.memory_space<vmem>>, vector<8x8xf32>,
    return
  }
  func.func @transform_0(%arg0: i32) -> (i32, i32) {
    %c0_i32 = arith.constant 0 : i32
    %c0_i32_0 = arith.constant 0 : i32
    return %arg0, %c0_i32 : i32, i32
  }
  func.func @transform_1(%arg0: i32) -> (i32, i32) {
    %c0_i32 = arith.constant 0 : i32
    %c0_i32_0 = arith.constant 0 : i32
    %c0_i32_1 = arith.constant 0 : i32
    return %c0_i32, %c0_i32_0 : i32, i32
  }
  func.func @transform_2(%arg0: i32) -> (i32, i32) {
    %c0_i32 = arith.constant 0 : i32
    %c0_i32_0 = arith.constant 0 : i32
    %c0_i32_1 = arith.constant 0 : i32
    return %c0_i32, %c0_i32_0 : i32, i32
  }
  func.func @transform_3(%arg0: i32) -> (i32, i32) {
    %c0_i32 = arith.constant 0 : i32
    %c0_i32_0 = arith.constant 0 : i32
    %c0_i32_1 = arith.constant 0 : i32
    return %c0_i32, %c0_i32_0 : i32, i32
  }
  func.func @transform_4(%arg0: i32) -> (i32, i32) {
    %c0_i32 = arith.constant 0 : i32
    %c0_i32_0 = arith.constant 0 : i32
    %c0_i32_1 = arith.constant 0 : i32
    return %c0_i32, %c0_i32_0 : i32, i32
  }
  func.func @transform_5(%arg0: i32) -> (i32, i32) {
    %c0_i32 = arith.constant 0 : i32
    %c0_i32_0 = arith.constant 0 : i32
    %c0_i32_1 = arith.constant 0 : i32
    return %c0_i32, %c0_i32_0 : i32, i32
  }
  func.func @transform_6(%arg0: i32) -> (i32, i32) {
    %c0_i32 = arith.constant 0 : i32
    %c0_i32_0 = arith.constant 0 : i32
    %c0_i32_1 = arith.constant 0 : i32
    return %c0_i32, %c0_i32_0 : i32, i32
  }
  func.func @transform_7(%arg0: i32) -> (i32, i32) {
    %c0_i32 = arith.constant 0 : i32
    %c0_i32_0 = arith.constant 0 : i32
    return %arg0, %c0_i32 : i32, i32
  }
}

</mosaic_0001>

<llo_original>
// kernel: tpu_custom_call.1
$region0: #{tpu_custom_call.1}
  #allocation0 [shape = 'u32[]', space=smem, size = 0x4, offset = 0x4, fixed_abs, tag = 'smem constant byte address 0x4 - core index']
  #allocation1 [shape = 'u32[144,128]{1,0:T(1,128)}', space=vmem, size = 0x12000, scoped, tag = 'internal scratch']
  %s0 = inlined_call_operand.vmem [shape: f32[2,32], index: 0, kind: input, shape index: {}]
  %s1 = inlined_call_operand.vmem [shape: f32[32,128], index: 1, kind: input, shape index: {}]
  %s2 = inlined_call_operand.vmem [shape: f32[1,128], index: 2, kind: input, shape index: {}]
  %s3 = inlined_call_operand.vmem [shape: f32[128,64], index: 3, kind: input, shape index: {}]
  %s4 = inlined_call_operand.vmem [shape: f32[1,64], index: 4, kind: input, shape index: {}]
  %s5 = inlined_call_operand.vmem [shape: f32[64,8], index: 5, kind: input, shape index: {}]
  %s6 = inlined_call_operand.vmem [shape: f32[1,8], index: 6, kind: input, shape index: {}]
  %s7 = inlined_call_operand.hbm [shape: f32[2,8], index: 7, kind: output, shape index: {}]
  %s8 = sld [smem:[#allocation0]]
  $region38: #{tpu_custom_call.1} parent=0
    _
  %s10 = ssub.s32 1, %s8
  %s11 = scalar_select 0, %s10, %s8
  $region1: #{tpu_custom_call.1} parent=0
    #allocation2 [shape = 'u8[4096]{0}', space=vmem, size = 0x1000, scoped, tag = 'output window, operand 0, single buffered']
    #allocation3 [shape = 's32[1]{0}', space=sflag, size = 0x4, scoped, tag = 'scoped memory for tpu_custom_call.1']
    %12 = vsyncpa [#allocation3], 0
    // Predicated region
    $region2: #{tpu_custom_call.1} parent=1 // pred_check
      _
    $region3: #{tpu_custom_call.1} parent=1 // pred_check_branch
      %14 = sbr.rel (0) target = $region5
    $region4: #{tpu_custom_call.1} parent=1 // pred_region
      _
    $region5: #{tpu_custom_call.1} parent=1 // pred_fallthru
      _
    // Predicated region
    $region6: #{tpu_custom_call.1} parent=1 // pred_check
      _
    $region7: #{tpu_custom_call.1} parent=1 // pred_check_branch
      %16 = sbr.rel (0) target = $region9
    $region8: #{tpu_custom_call.1} parent=1 // pred_region
      _
    $region9: #{tpu_custom_call.1} parent=1 // pred_fallthru
      _
    // Predicated region
    $region10: #{tpu_custom_call.1} parent=1 // pred_check
      _
    $region11: #{tpu_custom_call.1} parent=1 // pred_check_branch
      %18 = sbr.rel (0) target = $region13
    $region12: #{tpu_custom_call.1} parent=1 // pred_region
      _
    $region13: #{tpu_custom_call.1} parent=1 // pred_fallthru
      _
    // Predicated region
    $region14: #{tpu_custom_call.1} parent=1 // pred_check
      _
    $region15: #{tpu_custom_call.1} parent=1 // pred_check_branch
      %20 = sbr.rel (0) target = $region17
    $region16: #{tpu_custom_call.1} parent=1 // pred_region
      _
    $region17: #{tpu_custom_call.1} parent=1 // pred_fallthru
      _
    // Predicated region
    $region18: #{tpu_custom_call.1} parent=1 // pred_check
      _
    $region19: #{tpu_custom_call.1} parent=1 // pred_check_branch
      %22 = sbr.rel (0) target = $region21
    $region20: #{tpu_custom_call.1} parent=1 // pred_region
      _
    $region21: #{tpu_custom_call.1} parent=1 // pred_fallthru
      _
    // Predicated region
    $region22: #{tpu_custom_call.1} parent=1 // pred_check
      _
    $region23: #{tpu_custom_call.1} parent=1 // pred_check_branch
      %24 = sbr.rel (0) target = $region25
    $region24: #{tpu_custom_call.1} parent=1 // pred_region
      _
    $region25: #{tpu_custom_call.1} parent=1 // pred_fallthru
      _
    // Predicated region
    $region26: #{tpu_custom_call.1} parent=1 // pred_check
      _
    $region27: #{tpu_custom_call.1} parent=1 // pred_check_branch
      %26 = sbr.rel (0) target = $region29
    $region28: #{tpu_custom_call.1} parent=1 // pred_region
      _
    $region29: #{tpu_custom_call.1} parent=1 // pred_fallthru
      _
    %v27 = vld [vmem:[%s0] sm:$0xff]
    %v28 = vld [vmem:[%s1] sm:$0xff]
    %v29 = vld [vmem:[%s1 + $0x8] sm:$0xff]
    %v30 = vld [vmem:[%s1 + $0x10] sm:$0xff]
    %v31 = vld [vmem:[%s1 + $0x18] sm:$0xff]
    %v32 = vld [vmem:[%s2] sm:$0x1]
    %v34 = vlaneseq
    %v35 = vshrl.u32 %v34, 7
    %v36 = vsub.s32 0, %v35
    %v37 = vrot.slane %v32, %v36
    %vm39 = vcmask 261120
    %v41 = vsel %vm39, %v27, 0
    %43 = vmatprep.subr.mxu0 0.0
    %44 = vmatpush1.msra.mxu0 0.0
    %45 = vmatprep.subr.mxu0 0.0
    %46 = vmatpush1.msra.mxu0 0.0
    %47 = vmatprep.subr.mxu0 0.0
    %48 = vmatpush1.msra.mxu0 0.0
    %49 = vmatprep.subr.mxu0 0.0
    %50 = vmatpush1.msra.mxu0 0.0
    %51 = vmatprep.subr.mxu0 0.0
    %52 = vmatpush1.msra.mxu0 0.0
    %53 = vmatprep.subr.mxu0 0.0
    %54 = vmatpush1.msra.mxu0 0.0
    %55 = vmatprep.subr.mxu0 0.0
    %56 = vmatpush1.msra.mxu0 0.0
    %57 = vmatprep.subr.mxu0 0.0
    %58 = vmatpush1.msra.mxu0 0.0
    %59 = vmatprep.subr.mxu0 0.0
    %60 = vmatpush1.msra.mxu0 0.0
    %61 = vmatprep.subr.mxu0 0.0
    %62 = vmatpush1.msra.mxu0 0.0
    %63 = vmatprep.subr.mxu0 0.0
    %64 = vmatpush1.msra.mxu0 0.0
    %65 = vmatprep.subr.mxu0 0.0
    %66 = vmatpush1.msra.mxu0 0.0
    %67 = vmatprep.subr.mxu0 0.0
    %68 = vmatpush1.msra.mxu0 %v31
    %69 = vmatprep.subr.mxu0 0.0
    %70 = vmatpush1.msra.mxu0 %v30
    %71 = vmatprep.subr.mxu0 0.0
    %72 = vmatpush1.msra.mxu0 %v29
    %73 = vmatprep.subr.mxu0 0.0
    %74 = vmatpush1.msra.mxu0 %v28
    %75 = vmatprep.subr.mxu0 0.0
    %76 = vmatpush2.msra.mxu0 0.0
    %77 = vmatprep.subr.mxu0 0.0
    %78 = vmatpush2.msra.mxu0 0.0
    %79 = vmatprep.subr.mxu0 0.0
    %80 = vmatpush2.msra.mxu0 0.0
    %81 = vmatprep.subr.mxu0 0.0
    %82 = vmatpush2.msra.mxu0 0.0
    %83 = vmatprep.subr.mxu0 0.0
    %84 = vmatpush2.msra.mxu0 0.0
    %85 = vmatprep.subr.mxu0 0.0
    %86 = vmatpush2.msra.mxu0 0.0
    %87 = vmatprep.subr.mxu0 0.0
    %88 = vmatpush2.msra.mxu0 0.0
    %89 = vmatprep.subr.mxu0 0.0
    %90 = vmatpush2.msra.mxu0 0.0
    %91 = vmatprep.subr.mxu0 0.0
    %92 = vmatpush2.msra.mxu0 0.0
    %93 = vmatprep.subr.mxu0 0.0
    %94 = vmatpush2.msra.mxu0 0.0
    %95 = vmatprep.subr.mxu0 0.0
    %96 = vmatpush2.msra.mxu0 0.0
    %97 = vmatprep.subr.mxu0 0.0
    %98 = vmatpush2.msra.mxu0 0.0
    %99 = vmatprep.subr.mxu0 0.0
    %100 = vmatpush2.msra.mxu0 0.0
    %101 = vmatprep.subr.mxu0 0.0
    %102 = vmatpush2.msra.mxu0 0.0
    %103 = vmatprep.subr.mxu0 0.0
    %104 = vmatpush2.msra.mxu0 0.0
    %105 = vmatprep.subr.mxu0 0.0
    %106 = vmatpush2.msra.mxu0 0.0
    %107 = vmatprep.mubr.f32.mxu0 0.0
    %108 = vmatmul.mubr.f32.gmra.mxu0 %v41
    %v109 = vpop.f32.mrf.mxu0
    %v110 = vadd.f32 %v37, %v109
    %v111 = vpop.f32.mrf.mxu0
    %112 = vdwg.mxu0
    %v113 = vmax.f32 %v110, 0.0
    %v114 = vld [vmem:[%s3] sm:$0xff]
    %v115 = vld [vmem:[%s3 + $0x8] sm:$0xff]
    %v116 = vld [vmem:[%s3 + $0x10] sm:$0xff]
    %v117 = vld [vmem:[%s3 + $0x18] sm:$0xff]
    %v118 = vld [vmem:[%s3 + $0x20] sm:$0xff]
    %v119 = vld [vmem:[%s3 + $0x28] sm:$0xff]
    %v120 = vld [vmem:[%s3 + $0x30] sm:$0xff]
    %v121 = vld [vmem:[%s3 + $0x38] sm:$0xff]
    %v122 = vld [vmem:[%s3 + $0x40] sm:$0xff]
    %v123 = vld [vmem:[%s3 + $0x48] sm:$0xff]
    %v124 = vld [vmem:[%s3 + $0x50] sm:$0xff]
    %v125 = vld [vmem:[%s3 + $0x58] sm:$0xff]
    %v126 = vld [vmem:[%s3 + $0x60] sm:$0xff]
    %v127 = vld [vmem:[%s3 + $0x68] sm:$0xff]
    %v128 = vld [vmem:[%s3 + $0x70] sm:$0xff]
    %v129 = vld [vmem:[%s3 + $0x78] sm:$0xff]
    %v130 = vld [vmem:[%s4] sm:$0x1]
    %v132 = vlaneseq
    %v133 = vshrl.u32 %v132, 7
    %v134 = vsub.s32 0, %v133
    %v135 = vrot.slane %v130, %v134
    %137 = vmatprep.subr.mxu0 0.0
    %138 = vmatpush1.msra.mxu0 %v129
    %139 = vmatprep.subr.mxu0 0.0
    %140 = vmatpush1.msra.mxu0 %v128
    %141 = vmatprep.subr.mxu0 0.0
    %142 = vmatpush1.msra.mxu0 %v127
    %143 = vmatprep.subr.mxu0 0.0
    %144 = vmatpush1.msra.mxu0 %v126
    %145 = vmatprep.subr.mxu0 0.0
    %146 = vmatpush1.msra.mxu0 %v125
    %147 = vmatprep.subr.mxu0 0.0
    %148 = vmatpush1.msra.mxu0 %v124
    %149 = vmatprep.subr.mxu0 0.0
    %150 = vmatpush1.msra.mxu0 %v123
    %151 = vmatprep.subr.mxu0 0.0
    %152 = vmatpush1.msra.mxu0 %v122
    %153 = vmatprep.subr.mxu0 0.0
    %154 = vmatpush1.msra.mxu0 %v121
    %155 = vmatprep.subr.mxu0 0.0
    %156 = vmatpush1.msra.mxu0 %v120
    %157 = vmatprep.subr.mxu0 0.0
    %158 = vmatpush1.msra.mxu0 %v119
    %159 = vmatprep.subr.mxu0 0.0
    %160 = vmatpush1.msra.mxu0 %v118
    %161 = vmatprep.subr.mxu0 0.0
    %162 = vmatpush1.msra.mxu0 %v117
    %163 = vmatprep.subr.mxu0 0.0
    %164 = vmatpush1.msra.mxu0 %v116
    %165 = vmatprep.subr.mxu0 0.0
    %166 = vmatpush1.msra.mxu0 %v115
    %167 = vmatprep.subr.mxu0 0.0
    %168 = vmatpush1.msra.mxu0 %v114
    %169 = vmatprep.subr.mxu0 0.0
    %170 = vmatpush2.msra.mxu0 0.0
    %171 = vmatprep.subr.mxu0 0.0
    %172 = vmatpush2.msra.mxu0 0.0
    %173 = vmatprep.subr.mxu0 0.0
    %174 = vmatpush2.msra.mxu0 0.0
    %175 = vmatprep.subr.mxu0 0.0
    %176 = vmatpush2.msra.mxu0 0.0
    %177 = vmatprep.subr.mxu0 0.0
    %178 = vmatpush2.msra.mxu0 0.0
    %179 = vmatprep.subr.mxu0 0.0
    %180 = vmatpush2.msra.mxu0 0.0
    %181 = vmatprep.subr.mxu0 0.0
    %182 = vmatpush2.msra.mxu0 0.0
    %183 = vmatprep.subr.mxu0 0.0
    %184 = vmatpush2.msra.mxu0 0.0
    %185 = vmatprep.subr.mxu0 0.0
    %186 = vmatpush2.msra.mxu0 0.0
    %187 = vmatprep.subr.mxu0 0.0
    %188 = vmatpush2.msra.mxu0 0.0
    %189 = vmatprep.subr.mxu0 0.0
    %190 = vmatpush2.msra.mxu0 0.0
    %191 = vmatprep.subr.mxu0 0.0
    %192 = vmatpush2.msra.mxu0 0.0
    %193 = vmatprep.subr.mxu0 0.0
    %194 = vmatpush2.msra.mxu0 0.0
    %195 = vmatprep.subr.mxu0 0.0
    %196 = vmatpush2.msra.mxu0 0.0
    %197 = vmatprep.subr.mxu0 0.0
    %198 = vmatpush2.msra.mxu0 0.0
    %199 = vmatprep.subr.mxu0 0.0
    %200 = vmatpush2.msra.mxu0 0.0
    %201 = vmatprep.mubr.f32.mxu0 0.0
    %202 = vmatmul.mubr.f32.gmra.mxu0 %v113
    %v203 = vpop.f32.mrf.mxu0
    %v204 = vadd.f32 %v135, %v203
    %v205 = vpop.f32.mrf.mxu0
    %206 = vdwg.mxu0
    %v207 = vmax.f32 %v204, 0.0
    %v208 = vld [vmem:[%s5] sm:$0xff]
    %v209 = vld [vmem:[%s5 + $0x8] sm:$0xff]
    %v210 = vld [vmem:[%s5 + $0x10] sm:$0xff]
    %v211 = vld [vmem:[%s5 + $0x18] sm:$0xff]
    %v212 = vld [vmem:[%s5 + $0x20] sm:$0xff]
    %v213 = vld [vmem:[%s5 + $0x28] sm:$0xff]
    %v214 = vld [vmem:[%s5 + $0x30] sm:$0xff]
    %v215 = vld [vmem:[%s5 + $0x38] sm:$0xff]
    %v216 = vld [vmem:[%s6] sm:$0x1]
    %v218 = vlaneseq
    %v219 = vshrl.u32 %v218, 7
    %v220 = vsub.s32 0, %v219
    %v221 = vrot.slane %v216, %v220
    %vm223 = vcmask 523264
    %v225 = vsel %vm223, %v207, 0
    %227 = vmatprep.subr.mxu0 0.0
    %228 = vmatpush1.msra.mxu0 0.0
    %229 = vmatprep.subr.mxu0 0.0
    %230 = vmatpush1.msra.mxu0 0.0
    %231 = vmatprep.subr.mxu0 0.0
    %232 = vmatpush1.msra.mxu0 0.0
    %233 = vmatprep.subr.mxu0 0.0
    %234 = vmatpush1.msra.mxu0 0.0
    %235 = vmatprep.subr.mxu0 0.0
    %236 = vmatpush1.msra.mxu0 0.0
    %237 = vmatprep.subr.mxu0 0.0
    %238 = vmatpush1.msra.mxu0 0.0
    %239 = vmatprep.subr.mxu0 0.0
    %240 = vmatpush1.msra.mxu0 0.0
    %241 = vmatprep.subr.mxu0 0.0
    %242 = vmatpush1.msra.mxu0 0.0
    %243 = vmatprep.subr.mxu0 0.0
    %244 = vmatpush1.msra.mxu0 %v215
    %245 = vmatprep.subr.mxu0 0.0
    %246 = vmatpush1.msra.mxu0 %v214
    %247 = vmatprep.subr.mxu0 0.0
    %248 = vmatpush1.msra.mxu0 %v213
    %249 = vmatprep.subr.mxu0 0.0
    %250 = vmatpush1.msra.mxu0 %v212
    %251 = vmatprep.subr.mxu0 0.0
    %252 = vmatpush1.msra.mxu0 %v211
    %253 = vmatprep.subr.mxu0 0.0
    %254 = vmatpush1.msra.mxu0 %v210
    %255 = vmatprep.subr.mxu0 0.0
    %256 = vmatpush1.msra.mxu0 %v209
    %257 = vmatprep.subr.mxu0 0.0
    %258 = vmatpush1.msra.mxu0 %v208
    %259 = vmatprep.subr.mxu0 0.0
    %260 = vmatpush2.msra.mxu0 0.0
    %261 = vmatprep.subr.mxu0 0.0
    %262 = vmatpush2.msra.mxu0 0.0
    %263 = vmatprep.subr.mxu0 0.0
    %264 = vmatpush2.msra.mxu0 0.0
    %265 = vmatprep.subr.mxu0 0.0
    %266 = vmatpush2.msra.mxu0 0.0
    %267 = vmatprep.subr.mxu0 0.0
    %268 = vmatpush2.msra.mxu0 0.0
    %269 = vmatprep.subr.mxu0 0.0
    %270 = vmatpush2.msra.mxu0 0.0
    %271 = vmatprep.subr.mxu0 0.0
    %272 = vmatpush2.msra.mxu0 0.0
    %273 = vmatprep.subr.mxu0 0.0
    %274 = vmatpush2.msra.mxu0 0.0
    %275 = vmatprep.subr.mxu0 0.0
    %276 = vmatpush2.msra.mxu0 0.0
    %277 = vmatprep.subr.mxu0 0.0
    %278 = vmatpush2.msra.mxu0 0.0
    %279 = vmatprep.subr.mxu0 0.0
    %280 = vmatpush2.msra.mxu0 0.0
    %281 = vmatprep.subr.mxu0 0.0
    %282 = vmatpush2.msra.mxu0 0.0
    %283 = vmatprep.subr.mxu0 0.0
    %284 = vmatpush2.msra.mxu0 0.0
    %285 = vmatprep.subr.mxu0 0.0
    %286 = vmatpush2.msra.mxu0 0.0
    %287 = vmatprep.subr.mxu0 0.0
    %288 = vmatpush2.msra.mxu0 0.0
    %289 = vmatprep.subr.mxu0 0.0
    %290 = vmatpush2.msra.mxu0 0.0
    %291 = vmatprep.mubr.f32.mxu0 0.0
    %292 = vmatmul.mubr.f32.gmra.mxu0 %v225
    %v293 = vpop.f32.mrf.mxu0
    %v294 = vadd.f32 %v221, %v293
    %v295 = vpop.f32.mrf.mxu0
    %296 = vdwg.mxu0
    %v297 = vtanh.pop %v294
    %vm298 = vcmask 64512
    %299 = vst.msk [vmem:[#allocation2] sm:$0xff] %vm298, %v297
    // Predicated region
    $region30: #{tpu_custom_call.1} parent=1 // pred_check
      _
    $region31: #{tpu_custom_call.1} parent=1 // pred_check_branch
      %301 = sbr.rel (0) target = $region33
    $region32: #{tpu_custom_call.1} parent=1 // pred_region
      %s303 = ssub.s32 128, 32
      %304 = vsyncadd [#allocation3], %s303
      %s305 = sshll.u32 [#allocation2], 4
      %s306 = int_to_ptr.vmem [resolvable:$true] %s305
      %311 = dma.vmem_to_hbm [thread:$0]  %s306, 32, %s7, [#allocation3], 32, 32, 2
    $region33: #{tpu_custom_call.1} parent=1 // pred_fallthru
      _
    // Predicated region
    $region34: #{tpu_custom_call.1} parent=1 // pred_check
      _
    $region35: #{tpu_custom_call.1} parent=1 // pred_check_branch
      %313 = sbr.rel (0) target = $region37
    $region36: #{tpu_custom_call.1} parent=1 // pred_region
      %314 = dma.done [#allocation3], 128
    $region37: #{tpu_custom_call.1} parent=1 // pred_fallthru
      _
    %315 = vsyncpa [#allocation3], 1

</llo_original>
